<compile_context>
chip_gen: v7x
topology: tpu7x:2x2x1
jax: 0.10.0
libtpu: 0.0.40
codegen_flags: <defaults>
</compile_context>

<pallas_src>
import functools

import jax
import jax.numpy as jnp
from jax.experimental import pallas as pl
from jax.experimental.pallas import tpu as pltpu


# --------------------------------------------------------------------------
# Sizing helpers
# --------------------------------------------------------------------------
def _sublane_pack(dtype) -> int:
    """Sublane packing unit: 8 rows for f32, 16 for bf16, 32 for int8/fp8."""
    itemsize = jnp.dtype(dtype).itemsize
    return max(8, (8 * 4) // itemsize)


def _vmem_limit_bytes() -> int:
    """Generation-aware scoped-VMEM limit: ~75% of physical, v7x-safe fallback."""
    try:
        cap = int(pltpu.get_tpu_info().vmem_capacity_bytes)
    except Exception:
        cap = 64 * 1024 * 1024  # v7x has 64 MiB / TensorCore; v5e/v6e have 128 MiB.
    return (cap * 3) // 4


def _pick_batch_tile(batch: int, per_row_bytes: int, align: int,
                     vmem_limit: int, cap=None) -> int:
    """Largest batch tile whose double-buffered in+out working set fits VMEM."""
    # Live bytes ~= 2 (double buffer) * tb * per_row_bytes; keep <= half the limit.
    tb = (vmem_limit // 4) // per_row_bytes
    if cap is not None:
        tb = min(tb, cap)
    tb = max(align, (tb // align) * align)
    if batch > tb:
        return tb
    # Whole batch fits in one tile.  If there is enough work, split once so
    # dimension_semantics=("parallel",) can shard the grid across TensorCores.
    if cap is None and batch >= 2 * align and batch * per_row_bytes >= (4 << 20):
        half = (batch + 1) // 2
        return ((half + align - 1) // align) * align
    return batch


# --------------------------------------------------------------------------
# Kernels (pure VPU/EUP elementwise work)
# --------------------------------------------------------------------------
def _act_sub_up_kernel(pq_ref, a_ref, out_ref, *, dim: int):
    """(batch, 2*dim) layout: out = [p + a*tanh(q), q] as one dense store."""
    pq = pq_ref[...]                                     # (tb, 2*dim)
    p, q = pq[:, :dim], pq[:, dim:]
    upd = (a_ref[...] * jnp.tanh(q)).astype(pq.dtype)    # (1, dim) broadcast
    # Single full-width store; the intra-vreg shuffle for the concat is hidden
    # under the HBM-bound stream at these widths.
    out_ref[...] = jnp.concatenate([p + upd, q], axis=-1)


def _act_sub_up_t_kernel(pq_ref, a_ref, outp_ref, *, dim: int):
    """(2*dim, batch) lane-dense layout: write only the updated p rows."""
    pq = pq_ref[...]                                     # (2*dim, tb)
    p, q = pq[:dim, :], pq[dim:, :]                      # sublane-aligned slices
    outp_ref[...] = p + (a_ref[...] * jnp.tanh(q)).astype(pq.dtype)


# --------------------------------------------------------------------------
# Wrappers
# --------------------------------------------------------------------------
@functools.partial(jax.jit, static_argnames=("dim", "inverse", "max_rows"))
def activation_sub_up_forward(pq: jax.Array, a: jax.Array, *, dim: int,
                              inverse: bool = False,
                              max_rows=None) -> jax.Array:
    """Module-faithful layout: pq is (batch, 2*dim); returns a new array."""
    batch, feat = pq.shape
    assert feat == 2 * dim
    dtype = pq.dtype
    itemsize = jnp.dtype(dtype).itemsize

    # Sign baked into the parameter.  Cast to pq.dtype matches PyTorch, which
    # builds the activation matrix in pq's dtype (documented numerics choice).
    sign = -1.0 if inverse else 1.0
    a_signed = (sign * a).astype(dtype).reshape(1, dim)

    vmem_limit = _vmem_limit_bytes()
    sub = _sublane_pack(dtype)
    per_row_bytes = 2 * feat * itemsize            # input row + output row in VMEM
    tb = _pick_batch_tile(batch, per_row_bytes, sub, vmem_limit, cap=max_rows)
    grid = (pl.cdiv(batch, tb),)

    cost = pl.CostEstimate(
        flops=2 * batch * dim,                     # one mul + one add per q element
        transcendentals=batch * dim,               # tanh on the q-half only
        bytes_accessed=2 * batch * feat * itemsize + dim * itemsize,
    )
    kernel = functools.partial(_act_sub_up_kernel, dim=dim)
    return pl.pallas_call(
        kernel,
        out_shape=jax.ShapeDtypeStruct((batch, feat), dtype),
        grid_spec=pltpu.PrefetchScalarGridSpec(
            num_scalar_prefetch=0,
            grid=grid,
            in_specs=[
                pl.BlockSpec((tb, feat), lambda i: (i, 0)),   # pq tile
                pl.BlockSpec((1, dim), lambda i: (0, 0)),     # a (constant index -> DMA elided)
            ],
            out_specs=pl.BlockSpec((tb, feat), lambda i: (i, 0)),
        ),
        compiler_params=pltpu.CompilerParams(
            dimension_semantics=("parallel",),     # shards batch blocks across TCs
            vmem_limit_bytes=vmem_limit,
        ),
        cost_estimate=cost,
    )(pq, a_signed)


@functools.partial(jax.jit, static_argnames=("dim", "inverse", "max_cols"),
                   donate_argnums=(0,))
def activation_sub_up_forward_t(pq_t: jax.Array, a: jax.Array, *, dim: int,
                                inverse: bool = False,
                                max_cols=None) -> jax.Array:
    """Lane-dense layout: pq_t is (2*dim, batch), batch on the 128-lane axis.

    pq_t is DONATED and updated in place: only the p rows are rewritten, the q
    rows stay valid in the aliased buffer.  Preferred for chained SympNets.
    """
    feat, batch = pq_t.shape
    assert feat == 2 * dim
    dtype = pq_t.dtype
    itemsize = jnp.dtype(dtype).itemsize
    sub = _sublane_pack(dtype)
    # Half-row writes need the p block to be whole sublane groups.
    assert dim % sub == 0, "transposed fast path needs dim % sublane_pack == 0"
    # TODO(synk): add a full-row-write fallback for sublane-unaligned dim.

    sign = -1.0 if inverse else 1.0
    a_signed = (sign * a).astype(dtype).reshape(dim, 1)

    vmem_limit = _vmem_limit_bytes()
    per_col_bytes = 3 * dim * itemsize             # 2*dim in + dim out per batch column
    tb = _pick_batch_tile(batch, per_col_bytes, 128, vmem_limit, cap=max_cols)
    grid = (pl.cdiv(batch, tb),)

    cost = pl.CostEstimate(
        flops=2 * batch * dim,
        transcendentals=batch * dim,
        bytes_accessed=3 * batch * dim * itemsize + dim * itemsize,
    )
    kernel = functools.partial(_act_sub_up_t_kernel, dim=dim)
    return pl.pallas_call(
        kernel,
        out_shape=jax.ShapeDtypeStruct((feat, batch), dtype),
        grid_spec=pltpu.PrefetchScalarGridSpec(
            num_scalar_prefetch=0,
            grid=grid,
            in_specs=[
                pl.BlockSpec((feat, tb), lambda i: (0, i)),   # pq_t tile (lane-dense)
                pl.BlockSpec((dim, 1), lambda i: (0, 0)),     # a (resident)
            ],
            # Only the p rows (block row 0) are written; the q rows are never
            # touched and remain correct via the input/output alias.
            out_specs=pl.BlockSpec((dim, tb), lambda i: (0, i)),
        ),
        compiler_params=pltpu.CompilerParams(
            dimension_semantics=("parallel",),
            vmem_limit_bytes=vmem_limit,
        ),
        input_output_aliases={0: 0},               # in-place update of donated pq_t
        cost_estimate=cost,
    )(pq_t, a_signed)


# --------------------------------------------------------------------------
# Pure-JAX reference of the PyTorch forward
# --------------------------------------------------------------------------
def _reference(pq, a, dim, inverse=False):
    sign = -1.0 if inverse else 1.0
    f = jnp.tanh(pq)
    upd = jnp.zeros_like(pq)
    upd = upd.at[:, :dim].set(sign * a[None, :] * f[:, dim:])
    return pq + upd


if __name__ == "__main__":
    key = jax.random.PRNGKey(0)
    k_a, k_pq, k_pq2 = jax.random.split(key, 3)

    dim = 16
    batch = 8
    a = jax.random.normal(k_a, (dim,), dtype=jnp.float32)       # nn.Parameter ~ randn(dim)
    pq = jax.random.normal(k_pq, (batch, 2 * dim), dtype=jnp.float32)

    # --- module-layout path: forward + inverse ---
    ref = _reference(pq, a, dim, inverse=False)
    out = jax.block_until_ready(activation_sub_up_forward(pq, a, dim=dim))
    assert out.shape == pq.shape and out.dtype == pq.dtype
    assert jnp.allclose(out, ref, atol=1e-5, rtol=1e-5)

    out_inv = jax.block_until_ready(
        activation_sub_up_forward(pq, a, dim=dim, inverse=True))
    assert jnp.allclose(out_inv, _reference(pq, a, dim, inverse=True),
                        atol=1e-5, rtol=1e-5)

    # --- lane-dense transposed path (donated input, in-place p-row update) ---
    pq_t = jnp.asarray(pq.T)                     # fresh buffer to donate
    out_t = jax.block_until_ready(activation_sub_up_forward_t(pq_t, a, dim=dim))
    del pq_t                                     # donated: must not be reused
    assert jnp.allclose(out_t, ref.T, atol=1e-5, rtol=1e-5)

    # --- tiled multi-block grids with partial last blocks (both layouts) ---
    batch_mid = 2056
    pq_mid = jax.random.normal(k_pq2, (batch_mid, 2 * dim), dtype=jnp.float32)
    ref_mid = _reference(pq_mid, a, dim, inverse=False)

    out_mid = jax.block_until_ready(
        activation_sub_up_forward(pq_mid, a, dim=dim, max_rows=512))
    assert jnp.allclose(out_mid, ref_mid, atol=1e-5, rtol=1e-5)

    pq_mid_t = jnp.asarray(pq_mid.T)
    out_mid_t = jax.block_until_ready(
        activation_sub_up_forward_t(pq_mid_t, a, dim=dim, max_cols=256))
    del pq_mid_t
    assert jnp.allclose(out_mid_t, ref_mid.T, atol=1e-5, rtol=1e-5)

    print("KERNEL_OK")
</pallas_src>

<mosaic_0001>
module attributes {stable_mosaic.version = 11 : i64} {
  func.func @_act_sub_up_kernel(%arg0: i32, %arg1: memref<8x32xf32, #tpu.memory_space<vmem>>, %arg2: memref<1x16xf32, #tpu.memory_space<vmem>>, %arg3: memref<8x32xf32, #tpu.memory_space<vmem>>) attributes {dimension_semantics = [#tpu.dimension_semantics<parallel>], iteration_bounds = array<i64: 1>, scalar_prefetch = 0 : i64, scratch_operands = 0 : i64, tpu.core_type = #tpu.core_type<tc>, window_params = [{transform_indices = @transform_0, window_bounds = array<i64: 8, 32>}, {pipeline_mode = #tpu.pipeline_mode<synchronous>, transform_indices = @transform_1, window_bounds = array<i64: 1, 16>}, {transform_indices = @transform_2, window_bounds = array<i64: 8, 32>}]} {
    %c0 = arith.constant 0 : index
    %c0_0 = arith.constant 0 : index
    %0 = vector.load %arg1[%c0, %c0_0] : memref<8x32xf32, #tpu.memory_space<vmem>>, vector<8x32xf32>
    %1 = vector.extract_strided_slice %0 {offsets = [0, 0], sizes = [8, 16], strides = [1, 1]} : vector<8x32xf32> to vector<8x16xf32>
    %2 = vector.extract_strided_slice %0 {offsets = [0, 16], sizes = [8, 16], strides = [1, 1]} : vector<8x32xf32> to vector<8x16xf32>
    %c0_1 = arith.constant 0 : index
    %c0_2 = arith.constant 0 : index
    %3 = vector.load %arg2[%c0_1, %c0_2] : memref<1x16xf32, #tpu.memory_space<vmem>>, vector<1x16xf32>
    %4 = math.tanh %2 : vector<8x16xf32>
    %5 = vector.broadcast %3 : vector<1x16xf32> to vector<8x16xf32>
    %6 = arith.mulf %5, %4 : vector<8x16xf32>
    %7 = arith.addf %1, %6 : vector<8x16xf32>
    %8 = tpu.concatenate %7, %2 in 1 : vector<8x16xf32>, vector<8x16xf32> -> vector<8x32xf32>
    %c0_3 = arith.constant 0 : index
    %c0_4 = arith.constant 0 : index
    %9 = vector.load %arg3[%c0_3, %c0_4] : memref<8x32xf32, #tpu.memory_space<vmem>>, vector<8x32xf32>
    tpu.vector_store %arg3[%c0_3, %c0_4], %8 {strides = array<i32>} : memref<8x32xf32, #tpu.memory_space<vmem>>, vector<8x32xf32>,
    return
  }
  func.func @transform_0(%arg0: i32) -> (i32, i32) {
    %c0_i32 = arith.constant 0 : i32
    %c0_i32_0 = arith.constant 0 : i32
    return %arg0, %c0_i32 : i32, i32
  }
  func.func @transform_1(%arg0: i32) -> (i32, i32) {
    %c0_i32 = arith.constant 0 : i32
    %c0_i32_0 = arith.constant 0 : i32
    %c0_i32_1 = arith.constant 0 : i32
    return %c0_i32, %c0_i32_0 : i32, i32
  }
  func.func @transform_2(%arg0: i32) -> (i32, i32) {
    %c0_i32 = arith.constant 0 : i32
    %c0_i32_0 = arith.constant 0 : i32
    return %arg0, %c0_i32 : i32, i32
  }
}

</mosaic_0001>

<llo_original>
// kernel: activation_sub_up_forward.1
$region0: #{activation_sub_up_forward.1}
  #allocation0 [shape = 'u32[]', space=smem, size = 0x4, offset = 0x4, fixed_abs, tag = 'smem constant byte address 0x4 - core index']
  #allocation1 [shape = 'u32[144,128]{1,0:T(1,128)}', space=vmem, size = 0x12000, scoped, tag = 'internal scratch']
  %s0 = inlined_call_operand.hbm [shape: f32[8,32], index: 0, kind: input, shape index: {}]
  %s1 = inlined_call_operand.vmem [shape: f32[1,16], index: 1, kind: input, shape index: {}]
  %s2 = inlined_call_operand.hbm [shape: f32[8,32], index: 2, kind: output, shape index: {}]
  %s3 = sld [smem:[#allocation0]]
  $region22: #{activation_sub_up_forward.1} parent=0
    _
  %s5 = ssub.s32 1, %s3
  %s6 = scalar_select 0, %s5, %s3
  $region1: #{activation_sub_up_forward.1} parent=0
    #allocation2 [shape = 'u8[4096]{0}', space=vmem, size = 0x1000, scoped, tag = 'input window, operand 0, single buffered']
    #allocation3 [shape = 's32[1]{0}', space=sflag, size = 0x4, scoped, tag = 'scoped memory for activation_sub_up_forward.1']
    #allocation4 [shape = 's32[1]{0}', space=sflag, size = 0x4, scoped, tag = 'scoped memory for activation_sub_up_forward.1']
    #allocation5 [shape = 'u8[4096]{0}', space=vmem, size = 0x1000, scoped, tag = 'output window, operand 0, single buffered']
    %7 = vsyncpa [#allocation3], 0
    %8 = vsyncpa [#allocation4], 0
    // Predicated region
    $region2: #{activation_sub_up_forward.1} parent=1 // pred_check
      _
    $region3: #{activation_sub_up_forward.1} parent=1 // pred_check_branch
      %10 = sbr.rel (0) target = $region5
    $region4: #{activation_sub_up_forward.1} parent=1 // pred_region
      %s12 = ssub.s32 128, 128
      %13 = vsyncadd [#allocation3], %s12
      %s15 = sshll.u32 [#allocation2], 4
      %s16 = int_to_ptr.vmem [resolvable:$true] %s15
      %18 = dma.hbm_to_vmem [thread:$0]  %s0, 128, %s16, [#allocation3]
    $region5: #{activation_sub_up_forward.1} parent=1 // pred_fallthru
      _
    // Predicated region
    $region6: #{activation_sub_up_forward.1} parent=1 // pred_check
      _
    $region7: #{activation_sub_up_forward.1} parent=1 // pred_check_branch
      %20 = sbr.rel (0) target = $region9
    $region8: #{activation_sub_up_forward.1} parent=1 // pred_region
      _
    $region9: #{activation_sub_up_forward.1} parent=1 // pred_fallthru
      _
    // Predicated region
    $region10: #{activation_sub_up_forward.1} parent=1 // pred_check
      _
    $region11: #{activation_sub_up_forward.1} parent=1 // pred_check_branch
      %22 = sbr.rel (0) target = $region13
    $region12: #{activation_sub_up_forward.1} parent=1 // pred_region
      %23 = dma.done [#allocation3], 128
    $region13: #{activation_sub_up_forward.1} parent=1 // pred_fallthru
      _
    %v24 = vld [vmem:[#allocation2] sm:$0xff]
    %v25 = vld [vmem:[%s1] sm:$0x1]
    %v26 = vtanh.pop %v24
    %v28 = vlaneseq
    %v29 = vshrl.u32 %v28, 7
    %v30 = vsub.s32 0, %v29
    %v31 = vrot.slane %v25, %v30
    %34 = vrot.lane.b32.xlu0 %v26, 112
    %v35 = vpop.permute.xlu0 %34
    %v37 = vmul.f32 %v31, %v35
    %v38 = vadd.f32 %v24, %v37
    %vm39 = vcmask 130048
    %v40 = vsel %vm39, %v38, %v24
    %vm41 = vcmask 261120
    %42 = vst.msk [vmem:[#allocation5] sm:$0xff] %vm41, %v40
    // Predicated region
    $region14: #{activation_sub_up_forward.1} parent=1 // pred_check
      _
    $region15: #{activation_sub_up_forward.1} parent=1 // pred_check_branch
      %44 = sbr.rel (0) target = $region17
    $region16: #{activation_sub_up_forward.1} parent=1 // pred_region
      %s46 = ssub.s32 128, 128
      %47 = vsyncadd [#allocation4], %s46
      %s49 = sshll.u32 [#allocation5], 4
      %s50 = int_to_ptr.vmem [resolvable:$true] %s49
      %52 = dma.vmem_to_hbm [thread:$0]  %s50, 128, %s2, [#allocation4]
    $region17: #{activation_sub_up_forward.1} parent=1 // pred_fallthru
      _
    // Predicated region
    $region18: #{activation_sub_up_forward.1} parent=1 // pred_check
      _
    $region19: #{activation_sub_up_forward.1} parent=1 // pred_check_branch
      %54 = sbr.rel (0) target = $region21
    $region20: #{activation_sub_up_forward.1} parent=1 // pred_region
      %55 = dma.done [#allocation4], 128
    $region21: #{activation_sub_up_forward.1} parent=1 // pred_fallthru
      _
    %56 = vsyncpa [#allocation3], 1
    %57 = vsyncpa [#allocation4], 1

</llo_original>
